<compile_context>
chip_gen: v5e
topology: v5e:2x2
jax: 0.10.0
libtpu: 0.0.40
codegen_flags: <defaults>
</compile_context>

<pallas_src>
from functools import partial

import numpy as np
import jax
import jax.numpy as jnp
from jax.experimental import pallas as pl
from jax.experimental.pallas import tpu as pltpu


# ---------------------------------------------------------------------------
# Filter construction (deterministic port of IntUpscale.__init__, numpy only)
# ---------------------------------------------------------------------------
def kernel_cubic(zoom, phase, length=None):
    assert zoom > 0
    lower_bound = np.ceil(-2 * zoom - phase)
    higher_bound = np.floor(2 * zoom - phase)
    anchor = max(abs(lower_bound), abs(higher_bound))
    index = np.arange(-anchor + 1, anchor + 1)
    if length is not None:
        assert length >= 2 * anchor
        anchor = np.ceil(length / 2)
        index = np.arange(-anchor + 1, length - anchor + 1)
    pos = abs(index + phase) / zoom
    kernel = np.zeros(np.size(pos))
    idx = pos < 2
    kernel[idx] = -0.5 * pos[idx] ** 3 + 2.5 * pos[idx] ** 2 - 4 * pos[idx] + 2
    idx = pos < 1
    kernel[idx] = 1.5 * pos[idx] ** 3 - 2.5 * pos[idx] ** 2 + 1
    kernel = kernel * zoom / np.sum(kernel)
    return kernel


def kernel_lanczos(a, zoom, phase, length=None):
    assert a > 0 and zoom > 0
    lower_bound = np.ceil(-a * zoom - phase)
    higher_bound = np.floor(a * zoom - phase)
    anchor = max(abs(lower_bound), abs(higher_bound))
    index = np.arange(-anchor + 1, anchor + 1)
    if length is not None:
        assert length >= 2 * anchor
        anchor = np.ceil(length / 2)
        index = np.arange(-anchor + 1, length - anchor + 1)
    pos = abs(index + phase) / zoom
    kernel = a * np.sin(np.pi * pos) * np.sin(np.pi * pos / a) / (np.pi ** 2 * pos * pos)
    kernel[pos > a] = 0
    kernel[pos == 0.0] = 1
    kernel = kernel * zoom / np.sum(kernel)
    return kernel


def build_int_upscale_filters(nfeat, stride, mode="bicubic", param=4):
    """Returns (weight_4d, fh_padded(1,Lh), fv_padded(1,Lv)) exactly as IntUpscale builds them."""
    Sh, Sw = stride
    assert isinstance(Sh, int) and isinstance(Sw, int)
    if mode == "bicubic":
        fh = np.asarray([kernel_cubic(Sw, -(Sw - 1.0) / 2.0)])
        fv = np.asarray([kernel_cubic(Sh, -(Sh - 1.0) / 2.0)])
    else:
        assert mode == "lanczos"
        fh = np.asarray([kernel_lanczos(param, Sw, -(Sw - 1.0) / 2.0)])
        fv = np.asarray([kernel_lanczos(param, Sh, -(Sh - 1.0) / 2.0)])
    a = np.size(fh)
    fh = np.pad(fh, ((0, 0), (0, int(np.ceil(a / Sw) * Sw) - a)), mode="constant")
    b = np.size(fv)
    fv = np.pad(fv, ((0, 0), (0, int(np.ceil(b / Sh) * Sh) - b)), mode="constant")
    f2d = fh * fv.T                                    # (Lv, Lh), f2d[r, c] = fv[r] * fh[c]
    groups = Sh * Sw
    f = np.zeros([groups * nfeat, nfeat, f2d.shape[0] // Sh, f2d.shape[1] // Sw])
    for k in range(nfeat):
        g = groups - 1
        for i in range(Sh):
            for j in range(Sw):
                f[groups * k + g, k, :, :] = np.asarray(f2d[i::Sh, j::Sw])
                g -= 1
    return f.astype(np.float32), fh.astype(np.float32), fv.astype(np.float32)


# ---------------------------------------------------------------------------
# Pallas kernel: per channel-group separable polyphase FIR (depthwise conv)
# ---------------------------------------------------------------------------
def _upscale_kernel(x_ref, o_ref, *, Sh, Sw, Kh, Kw, Hout, Wout, fh, fv):
    # x_ref: (Cb, Hin, W)        f32 VMEM, Cb image channels, Hin = Hout + Kh - 1
    # o_ref: (Cb, G, Hout, Wout) f32 VMEM; channel g matches conv2d channel G*k + g.
    # fh/fv: trace-time Python float tap tuples (len Sw*Kw / Sh*Kh), closed over.
    G = Sh * Sw
    x = x_ref[...]                                     # loaded once, sliced in-register

    # Hoisted horizontal shifted views (identical for every horizontal phase j).
    xs = [x[:, :, q:q + Wout] for q in range(Kw)]

    for j in range(Sw):
        # Horizontal polyphase FIR (phase j): t[., h, w] = sum_q fh[j + q*Sw] * x[., h, w+q]
        hterms = [(fh[j + q * Sw], xs[q]) for q in range(Kw) if fh[j + q * Sw] != 0.0]
        if hterms:
            t = hterms[0][0] * hterms[0][1]
            for c, v in hterms[1:]:
                t = t + c * v
        else:
            t = jnp.zeros_like(xs[0])

        # Hoisted vertical shifted views (identical for every vertical phase i).
        ts = [t[:, p:p + Hout, :] for p in range(Kh)]

        for i in range(Sh):
            # Vertical polyphase FIR (phase i): acc = sum_p fv[i + p*Sh] * t[., h+p, w]
            vterms = [(fv[i + p * Sh], ts[p]) for p in range(Kh) if fv[i + p * Sh] != 0.0]
            if vterms:
                acc = vterms[0][0] * vterms[0][1]
                for c, v in vterms[1:]:
                    acc = acc + c * v
            else:
                acc = jnp.zeros_like(ts[0])
            # IntUpscale assigns phase (i, j) to conv output channel g = G-1-(i*Sw+j).
            o_ref[:, G - 1 - (i * Sw + j), :, :] = acc


# ---------------------------------------------------------------------------
# VMEM budgeting / blocking plan
# ---------------------------------------------------------------------------
def _vmem_budget_bytes():
    try:
        phys = int(pltpu.get_tpu_info().vmem_capacity_bytes)
    except Exception:
        phys = 64 << 20              # assume the smallest (v7x-sized) VMEM if unknown
    return (phys * 3) // 4           # ~48 MiB on v7x, ~96 MiB on v5e/v6e


def _vmem_estimate_bytes(cb, hout_b, W, Wout, G, Kh, Kw):
    hin = hout_b + Kh - 1
    per_chan = (2 * hin * W                   # double-buffered input block
                + 2 * G * hout_b * Wout       # double-buffered output block
                + (Kw + 1) * hin * Wout       # hoisted x slices + t intermediate
                + (Kh + 1) * hout_b * Wout)   # hoisted t slices + acc
    return 4 * cb * per_chan + (2 << 20)      # + fixed headroom for relayout scratch


def _plan_blocking(BC, Hout, W, Wout, G, Kh, Kw, budget):
    est = lambda cb, hb: _vmem_estimate_bytes(cb, hb, W, Wout, G, Kh, Kw)
    # Tiny problems: one grid step amortizes the fixed per-step overhead best.
    if est(BC, Hout) * 4 <= budget:
        return BC, Hout
    # Otherwise prefer >=2 grid steps so input/output DMAs pipeline with compute.
    for cb in range(BC // 2, 0, -1):
        if BC % cb == 0 and est(cb, Hout) <= budget:
            return cb, Hout
    # Fall back to one channel per step and row bands (with a Kh-1 halo).
    hb = Hout
    while hb > 8 and est(1, hb) > budget:
        hb = max(8, hb // 2)
    return 1, hb


# ---------------------------------------------------------------------------
# Forward wrapper: FIR kernel (possibly row-banded) + Muxout pixel shuffle
# ---------------------------------------------------------------------------
def int_upscale_forward(x, fh, fv, stride, *, max_band_rows=None):
    """x: (B, Cin, H, W) f32 NCHW; fh: (Sw*Kw,) taps; fv: (Sh*Kh,) taps (numpy)."""
    Sh, Sw = stride
    B, Cin, H, W = x.shape
    fh_t = tuple(float(v) for v in np.asarray(fh).reshape(-1))
    fv_t = tuple(float(v) for v in np.asarray(fv).reshape(-1))
    Lh, Lv = len(fh_t), len(fv_t)
    Kh, Kw = Lv // Sh, Lh // Sw
    assert Kh * Sh == Lv and Kw * Sw == Lh
    G = Sh * Sw
    Hout, Wout = H - Kh + 1, W - Kw + 1
    BC = B * Cin

    x_flat = x.astype(jnp.float32).reshape(BC, H, W)

    budget = _vmem_budget_bytes()
    Cb, Hb = _plan_blocking(BC, Hout, W, Wout, G, Kh, Kw, budget)
    if max_band_rows is not None:
        Hb = min(Hb, int(max_band_rows))

    def run_band(x_band, hout_b):
        hin = hout_b + Kh - 1
        kern = partial(_upscale_kernel, Sh=Sh, Sw=Sw, Kh=Kh, Kw=Kw,
                       Hout=hout_b, Wout=Wout, fh=fh_t, fv=fv_t)
        need = _vmem_estimate_bytes(Cb, hout_b, W, Wout, G, Kh, Kw)
        vmem_limit = int(min(budget, max(16 << 20, need + (2 << 20))))
        return pl.pallas_call(
            kern,
            out_shape=jax.ShapeDtypeStruct((BC, G, hout_b, Wout), jnp.float32),
            grid_spec=pltpu.PrefetchScalarGridSpec(
                num_scalar_prefetch=0,
                grid=(BC // Cb,),
                in_specs=[pl.BlockSpec((Cb, hin, W), lambda m: (m, 0, 0))],
                out_specs=pl.BlockSpec((Cb, G, hout_b, Wout), lambda m: (m, 0, 0, 0)),
            ),
            compiler_params=pltpu.CompilerParams(
                dimension_semantics=("parallel",),
                vmem_limit_bytes=vmem_limit,
            ),
        )(x_band)

    if Hb >= Hout:
        y = run_band(x_flat, Hout)                     # whole-image blocks
    else:
        # Row bands with a (Kh-1)-row halo; each band is a band-sized pallas_call so the
        # per-step VMEM footprint stays bounded (input halo duplication is << output size).
        bands = []
        r0 = 0
        while r0 < Hout:
            hb = min(Hb, Hout - r0)
            x_band = x_flat[:, r0:r0 + hb + Kh - 1, :]
            bands.append(run_band(x_band, hb))
            r0 += hb
        y = jnp.concatenate(bands, axis=2)

    # Muxout(pmode=None, colors=1): pixel shuffle. Conv channel c = G*k + g with
    # g -> within-group index (g//Sw, g%Sw); reshape/transpose/reshape fuses to one
    # XLA transpose (see TODO at top about folding it into the kernel store).
    y = y.reshape(B, Cin, Sh, Sw, Hout, Wout)
    return y.transpose(0, 1, 4, 2, 5, 3).reshape(B, Cin, Sh * Hout, Sw * Wout)


# ---------------------------------------------------------------------------
# Pure-JAX reference (dense conv with the exact IntUpscale weight buffer)
# ---------------------------------------------------------------------------
def int_upscale_reference(x, weight, stride):
    Sh, Sw = stride
    y = jax.lax.conv_general_dilated(
        x, weight, window_strides=(1, 1), padding="VALID",
        dimension_numbers=("NCHW", "OIHW", "NCHW"),
        precision=jax.lax.Precision.HIGHEST,
    )
    B, Cout, Hout, Wout = y.shape
    Ng = Cout // (Sh * Sw)
    return (
        y.reshape(B, Ng, Sh, Sw, Hout, Wout)
        .transpose(0, 1, 4, 2, 5, 3)
        .reshape(B, Ng, Sh * Hout, Sw * Wout)
    )


if __name__ == "__main__":
    nfeat = 4
    stride = (2, 2)
    B, H, W = 2, 16, 16

    weight_np, fh_np, fv_np = build_int_upscale_filters(nfeat, stride, mode="bicubic")
    weight = jnp.asarray(weight_np)                    # (16, 4, 4, 4), the module's buffer

    key = jax.random.PRNGKey(0)
    x = jax.random.normal(key, (B, nfeat, H, W), dtype=jnp.float32)

    # Main path (whole-image blocks, all channels in one grid step for this size).
    fwd = jax.jit(lambda xx: int_upscale_forward(xx, fh_np, fv_np, stride))
    out = jax.block_until_ready(fwd(x))

    # Also exercise the row-banded (halo) path that large images take.
    fwd_banded = jax.jit(
        lambda xx: int_upscale_forward(xx, fh_np, fv_np, stride, max_band_rows=8))
    out_banded = jax.block_until_ready(fwd_banded(x))

    ref = jax.block_until_ready(int_upscale_reference(x, weight, stride))
    assert out.shape == ref.shape == (B, nfeat, stride[0] * (H - 3), stride[1] * (W - 3))
    np.testing.assert_allclose(np.asarray(out), np.asarray(ref), rtol=1e-3, atol=1e-3)
    np.testing.assert_allclose(np.asarray(out_banded), np.asarray(ref), rtol=1e-3, atol=1e-3)

    print("KERNEL_OK")
</pallas_src>

<mosaic_0001>
module attributes {stable_mosaic.version = 11 : i64} {
  func.func @_upscale_kernel(%arg0: i32, %arg1: memref<8x16x16xf32, #tpu.memory_space<vmem>>, %arg2: memref<8x4x13x13xf32, #tpu.memory_space<vmem>>) attributes {dimension_semantics = [#tpu.dimension_semantics<parallel>], iteration_bounds = array<i64: 1>, scalar_prefetch = 0 : i64, scratch_operands = 0 : i64, tpu.core_type = #tpu.core_type<tc>, window_params = [{transform_indices = @transform_0, window_bounds = array<i64: 8, 16, 16>}, {transform_indices = @transform_1, window_bounds = array<i64: 8, 4, 13, 13>}]} {
    %c0 = arith.constant 0 : index
    %c0_0 = arith.constant 0 : index
    %c0_1 = arith.constant 0 : index
    %0 = vector.load %arg1[%c0, %c0_0, %c0_1] : memref<8x16x16xf32, #tpu.memory_space<vmem>>, vector<8x16x16xf32>
    %1 = vector.extract_strided_slice %0 {offsets = [0, 0, 0], sizes = [8, 16, 13], strides = [1, 1, 1]} : vector<8x16x16xf32> to vector<8x16x13xf32>
    %2 = vector.extract_strided_slice %0 {offsets = [0, 0, 1], sizes = [8, 16, 13], strides = [1, 1, 1]} : vector<8x16x16xf32> to vector<8x16x13xf32>
    %3 = vector.extract_strided_slice %0 {offsets = [0, 0, 2], sizes = [8, 16, 13], strides = [1, 1, 1]} : vector<8x16x16xf32> to vector<8x16x13xf32>
    %4 = vector.extract_strided_slice %0 {offsets = [0, 0, 3], sizes = [8, 16, 13], strides = [1, 1, 1]} : vector<8x16x16xf32> to vector<8x16x13xf32>
    %cst = arith.constant -2.343750e-02 : f32
    %5 = vector.broadcast %cst : f32 to vector<8x16x13xf32>
    %6 = arith.mulf %5, %1 : vector<8x16x13xf32>
    %cst_2 = arith.constant 0.2265625 : f32
    %7 = vector.broadcast %cst_2 : f32 to vector<8x16x13xf32>
    %8 = arith.mulf %7, %2 : vector<8x16x13xf32>
    %9 = arith.addf %6, %8 : vector<8x16x13xf32>
    %cst_3 = arith.constant 0.8671875 : f32
    %10 = vector.broadcast %cst_3 : f32 to vector<8x16x13xf32>
    %11 = arith.mulf %10, %3 : vector<8x16x13xf32>
    %12 = arith.addf %9, %11 : vector<8x16x13xf32>
    %cst_4 = arith.constant -7.031250e-02 : f32
    %13 = vector.broadcast %cst_4 : f32 to vector<8x16x13xf32>
    %14 = arith.mulf %13, %4 : vector<8x16x13xf32>
    %15 = arith.addf %12, %14 : vector<8x16x13xf32>
    %16 = vector.extract_strided_slice %15 {offsets = [0, 0, 0], sizes = [8, 13, 13], strides = [1, 1, 1]} : vector<8x16x13xf32> to vector<8x13x13xf32>
    %17 = vector.extract_strided_slice %15 {offsets = [0, 1, 0], sizes = [8, 13, 13], strides = [1, 1, 1]} : vector<8x16x13xf32> to vector<8x13x13xf32>
    %18 = vector.extract_strided_slice %15 {offsets = [0, 2, 0], sizes = [8, 13, 13], strides = [1, 1, 1]} : vector<8x16x13xf32> to vector<8x13x13xf32>
    %19 = vector.extract_strided_slice %15 {offsets = [0, 3, 0], sizes = [8, 13, 13], strides = [1, 1, 1]} : vector<8x16x13xf32> to vector<8x13x13xf32>
    %cst_5 = arith.constant -2.343750e-02 : f32
    %20 = vector.broadcast %cst_5 : f32 to vector<8x13x13xf32>
    %21 = arith.mulf %20, %16 : vector<8x13x13xf32>
    %cst_6 = arith.constant 0.2265625 : f32
    %22 = vector.broadcast %cst_6 : f32 to vector<8x13x13xf32>
    %23 = arith.mulf %22, %17 : vector<8x13x13xf32>
    %24 = arith.addf %21, %23 : vector<8x13x13xf32>
    %cst_7 = arith.constant 0.8671875 : f32
    %25 = vector.broadcast %cst_7 : f32 to vector<8x13x13xf32>
    %26 = arith.mulf %25, %18 : vector<8x13x13xf32>
    %27 = arith.addf %24, %26 : vector<8x13x13xf32>
    %cst_8 = arith.constant -7.031250e-02 : f32
    %28 = vector.broadcast %cst_8 : f32 to vector<8x13x13xf32>
    %29 = arith.mulf %28, %19 : vector<8x13x13xf32>
    %30 = arith.addf %27, %29 : vector<8x13x13xf32>
    %c0_9 = arith.constant 0 : index
    %c3 = arith.constant 3 : index
    %c0_10 = arith.constant 0 : index
    %c0_11 = arith.constant 0 : index
    %31 = vector.load %arg2[%c0_9, %c3, %c0_10, %c0_11] : memref<8x4x13x13xf32, #tpu.memory_space<vmem>>, vector<8x1x13x13xf32>
    %32 = vector.shape_cast %31 : vector<8x1x13x13xf32> to vector<8x13x13xf32>
    %33 = vector.shape_cast %30 : vector<8x13x13xf32> to vector<8x1x13x13xf32>
    tpu.vector_store %arg2[%c0_9, %c3, %c0_10, %c0_11], %33 {strides = array<i32>} : memref<8x4x13x13xf32, #tpu.memory_space<vmem>>, vector<8x1x13x13xf32>,
    %cst_12 = arith.constant -7.031250e-02 : f32
    %34 = vector.broadcast %cst_12 : f32 to vector<8x13x13xf32>
    %35 = arith.mulf %34, %16 : vector<8x13x13xf32>
    %cst_13 = arith.constant 0.8671875 : f32
    %36 = vector.broadcast %cst_13 : f32 to vector<8x13x13xf32>
    %37 = arith.mulf %36, %17 : vector<8x13x13xf32>
    %38 = arith.addf %35, %37 : vector<8x13x13xf32>
    %cst_14 = arith.constant 0.2265625 : f32
    %39 = vector.broadcast %cst_14 : f32 to vector<8x13x13xf32>
    %40 = arith.mulf %39, %18 : vector<8x13x13xf32>
    %41 = arith.addf %38, %40 : vector<8x13x13xf32>
    %cst_15 = arith.constant -2.343750e-02 : f32
    %42 = vector.broadcast %cst_15 : f32 to vector<8x13x13xf32>
    %43 = arith.mulf %42, %19 : vector<8x13x13xf32>
    %44 = arith.addf %41, %43 : vector<8x13x13xf32>
    %c0_16 = arith.constant 0 : index
    %c1 = arith.constant 1 : index
    %c0_17 = arith.constant 0 : index
    %c0_18 = arith.constant 0 : index
    %45 = vector.load %arg2[%c0_16, %c1, %c0_17, %c0_18] : memref<8x4x13x13xf32, #tpu.memory_space<vmem>>, vector<8x1x13x13xf32>
    %46 = vector.shape_cast %45 : vector<8x1x13x13xf32> to vector<8x13x13xf32>
    %47 = vector.shape_cast %44 : vector<8x13x13xf32> to vector<8x1x13x13xf32>
    tpu.vector_store %arg2[%c0_16, %c1, %c0_17, %c0_18], %47 {strides = array<i32>} : memref<8x4x13x13xf32, #tpu.memory_space<vmem>>, vector<8x1x13x13xf32>,
    %cst_19 = arith.constant -7.031250e-02 : f32
    %48 = vector.broadcast %cst_19 : f32 to vector<8x16x13xf32>
    %49 = arith.mulf %48, %1 : vector<8x16x13xf32>
    %cst_20 = arith.constant 0.8671875 : f32
    %50 = vector.broadcast %cst_20 : f32 to vector<8x16x13xf32>
    %51 = arith.mulf %50, %2 : vector<8x16x13xf32>
    %52 = arith.addf %49, %51 : vector<8x16x13xf32>
    %cst_21 = arith.constant 0.2265625 : f32
    %53 = vector.broadcast %cst_21 : f32 to vector<8x16x13xf32>
    %54 = arith.mulf %53, %3 : vector<8x16x13xf32>
    %55 = arith.addf %52, %54 : vector<8x16x13xf32>
    %cst_22 = arith.constant -2.343750e-02 : f32
    %56 = vector.broadcast %cst_22 : f32 to vector<8x16x13xf32>
    %57 = arith.mulf %56, %4 : vector<8x16x13xf32>
    %58 = arith.addf %55, %57 : vector<8x16x13xf32>
    %59 = vector.extract_strided_slice %58 {offsets = [0, 0, 0], sizes = [8, 13, 13], strides = [1, 1, 1]} : vector<8x16x13xf32> to vector<8x13x13xf32>
    %60 = vector.extract_strided_slice %58 {offsets = [0, 1, 0], sizes = [8, 13, 13], strides = [1, 1, 1]} : vector<8x16x13xf32> to vector<8x13x13xf32>
    %61 = vector.extract_strided_slice %58 {offsets = [0, 2, 0], sizes = [8, 13, 13], strides = [1, 1, 1]} : vector<8x16x13xf32> to vector<8x13x13xf32>
    %62 = vector.extract_strided_slice %58 {offsets = [0, 3, 0], sizes = [8, 13, 13], strides = [1, 1, 1]} : vector<8x16x13xf32> to vector<8x13x13xf32>
    %cst_23 = arith.constant -2.343750e-02 : f32
    %63 = vector.broadcast %cst_23 : f32 to vector<8x13x13xf32>
    %64 = arith.mulf %63, %59 : vector<8x13x13xf32>
    %cst_24 = arith.constant 0.2265625 : f32
    %65 = vector.broadcast %cst_24 : f32 to vector<8x13x13xf32>
    %66 = arith.mulf %65, %60 : vector<8x13x13xf32>
    %67 = arith.addf %64, %66 : vector<8x13x13xf32>
    %cst_25 = arith.constant 0.8671875 : f32
    %68 = vector.broadcast %cst_25 : f32 to vector<8x13x13xf32>
    %69 = arith.mulf %68, %61 : vector<8x13x13xf32>
    %70 = arith.addf %67, %69 : vector<8x13x13xf32>
    %cst_26 = arith.constant -7.031250e-02 : f32
    %71 = vector.broadcast %cst_26 : f32 to vector<8x13x13xf32>
    %72 = arith.mulf %71, %62 : vector<8x13x13xf32>
    %73 = arith.addf %70, %72 : vector<8x13x13xf32>
    %c0_27 = arith.constant 0 : index
    %c2 = arith.constant 2 : index
    %c0_28 = arith.constant 0 : index
    %c0_29 = arith.constant 0 : index
    %74 = vector.load %arg2[%c0_27, %c2, %c0_28, %c0_29] : memref<8x4x13x13xf32, #tpu.memory_space<vmem>>, vector<8x1x13x13xf32>
    %75 = vector.shape_cast %74 : vector<8x1x13x13xf32> to vector<8x13x13xf32>
    %76 = vector.shape_cast %73 : vector<8x13x13xf32> to vector<8x1x13x13xf32>
    tpu.vector_store %arg2[%c0_27, %c2, %c0_28, %c0_29], %76 {strides = array<i32>} : memref<8x4x13x13xf32, #tpu.memory_space<vmem>>, vector<8x1x13x13xf32>,
    %cst_30 = arith.constant -7.031250e-02 : f32
    %77 = vector.broadcast %cst_30 : f32 to vector<8x13x13xf32>
    %78 = arith.mulf %77, %59 : vector<8x13x13xf32>
    %cst_31 = arith.constant 0.8671875 : f32
    %79 = vector.broadcast %cst_31 : f32 to vector<8x13x13xf32>
    %80 = arith.mulf %79, %60 : vector<8x13x13xf32>
    %81 = arith.addf %78, %80 : vector<8x13x13xf32>
    %cst_32 = arith.constant 0.2265625 : f32
    %82 = vector.broadcast %cst_32 : f32 to vector<8x13x13xf32>
    %83 = arith.mulf %82, %61 : vector<8x13x13xf32>
    %84 = arith.addf %81, %83 : vector<8x13x13xf32>
    %cst_33 = arith.constant -2.343750e-02 : f32
    %85 = vector.broadcast %cst_33 : f32 to vector<8x13x13xf32>
    %86 = arith.mulf %85, %62 : vector<8x13x13xf32>
    %87 = arith.addf %84, %86 : vector<8x13x13xf32>
    %c0_34 = arith.constant 0 : index
    %c0_35 = arith.constant 0 : index
    %c0_36 = arith.constant 0 : index
    %c0_37 = arith.constant 0 : index
    %88 = vector.load %arg2[%c0_34, %c0_35, %c0_36, %c0_37] : memref<8x4x13x13xf32, #tpu.memory_space<vmem>>, vector<8x1x13x13xf32>
    %89 = vector.shape_cast %88 : vector<8x1x13x13xf32> to vector<8x13x13xf32>
    %90 = vector.shape_cast %87 : vector<8x13x13xf32> to vector<8x1x13x13xf32>
    tpu.vector_store %arg2[%c0_34, %c0_35, %c0_36, %c0_37], %90 {strides = array<i32>} : memref<8x4x13x13xf32, #tpu.memory_space<vmem>>, vector<8x1x13x13xf32>,
    return
  }
  func.func @transform_0(%arg0: i32) -> (i32, i32, i32) {
    %c0_i32 = arith.constant 0 : i32
    %c0_i32_0 = arith.constant 0 : i32
    %c0_i32_1 = arith.constant 0 : i32
    return %arg0, %c0_i32, %c0_i32_0 : i32, i32, i32
  }
  func.func @transform_1(%arg0: i32) -> (i32, i32, i32, i32) {
    %c0_i32 = arith.constant 0 : i32
    %c0_i32_0 = arith.constant 0 : i32
    %c0_i32_1 = arith.constant 0 : i32
    %c0_i32_2 = arith.constant 0 : i32
    return %arg0, %c0_i32, %c0_i32_0, %c0_i32_1 : i32, i32, i32, i32
  }
}

</mosaic_0001>

<llo_original>
// kernel: _lambda_.1
$region0: #{_lambda_.1}
  #allocation0 [shape = 'u32[]', space=smem, size = 0x4, offset = 0x4, fixed_abs, tag = 'smem constant byte address 0x4 - core index']
  #allocation1 [shape = 'u32[72,128]{1,0:T(1,128)}', space=vmem, size = 0x9000, scoped, tag = 'internal scratch']
  %s0 = inlined_call_operand.hbm [shape: f32[8,16,16], index: 0, kind: input, shape index: {}]
  %s1 = inlined_call_operand.vmem [shape: f32[8,4,13,13], index: 1, kind: output, shape index: {}]
  %s2 = sld [smem:[#allocation0]]
  $region18: #{_lambda_.1} parent=0
    _
  %s4 = ssub.s32 1, %s2
  %s5 = scalar_select 0, %s4, %s2
  $region1: #{_lambda_.1} parent=0
    #allocation2 [shape = 'u8[65536]{0}', space=vmem, size = 0x10000, scoped, tag = 'input window, operand 0, single buffered']
    #allocation3 [shape = 's32[1]{0}', space=sflag, size = 0x4, scoped, tag = 'scoped memory for _lambda_.1']
    %6 = vsyncpa [#allocation3], 0
    // Predicated region
    $region2: #{_lambda_.1} parent=1 // pred_check
      _
    $region3: #{_lambda_.1} parent=1 // pred_check_branch
      %8 = sbr.rel (0) target = $region5
    $region4: #{_lambda_.1} parent=1 // pred_region
      %10 = vsyncadd [#allocation3], 0
      %s11 = sshll.u32 %s0, 4
      %s12 = int_to_ptr.hbm [resolvable:$true] %s11
      %s13 = sshll.u32 [#allocation2], 4
      %s14 = int_to_ptr.vmem [resolvable:$true] %s13
      %19 = dma.hbm_to_vmem [thread:$0]  %s12, 2048, %s14, [#allocation3], 128, 128, 8
    $region5: #{_lambda_.1} parent=1 // pred_fallthru
      _
    // Predicated region
    $region6: #{_lambda_.1} parent=1 // pred_check
      _
    $region7: #{_lambda_.1} parent=1 // pred_check_branch
      %21 = sbr.rel (0) target = $region9
    $region8: #{_lambda_.1} parent=1 // pred_region
      %23 = dma.done [#allocation3], 2048
    $region9: #{_lambda_.1} parent=1 // pred_fallthru
      _
    %v24 = vld [vmem:[#allocation2] sm:$0xff]
    %v25 = vld [vmem:[#allocation2 + $0x8] sm:$0xff]
    %v26 = vld [vmem:[#allocation2 + $0x10] sm:$0xff]
    %v27 = vld [vmem:[#allocation2 + $0x18] sm:$0xff]
    %v28 = vld [vmem:[#allocation2 + $0x20] sm:$0xff]
    %v29 = vld [vmem:[#allocation2 + $0x28] sm:$0xff]
    %v30 = vld [vmem:[#allocation2 + $0x30] sm:$0xff]
    %v31 = vld [vmem:[#allocation2 + $0x38] sm:$0xff]
    %v32 = vld [vmem:[#allocation2 + $0x40] sm:$0xff]
    %v33 = vld [vmem:[#allocation2 + $0x48] sm:$0xff]
    %v34 = vld [vmem:[#allocation2 + $0x50] sm:$0xff]
    %v35 = vld [vmem:[#allocation2 + $0x58] sm:$0xff]
    %v36 = vld [vmem:[#allocation2 + $0x60] sm:$0xff]
    %v37 = vld [vmem:[#allocation2 + $0x68] sm:$0xff]
    %v38 = vld [vmem:[#allocation2 + $0x70] sm:$0xff]
    %v39 = vld [vmem:[#allocation2 + $0x78] sm:$0xff]
    %v40 = vmul.f32 %v24, -0.0234375
    %v41 = vmul.f32 %v25, -0.0234375
    %v42 = vmul.f32 %v26, -0.0234375
    %v43 = vmul.f32 %v27, -0.0234375
    %v44 = vmul.f32 %v28, -0.0234375
    %v45 = vmul.f32 %v29, -0.0234375
    %v46 = vmul.f32 %v30, -0.0234375
    %v47 = vmul.f32 %v31, -0.0234375
    %v48 = vmul.f32 %v32, -0.0234375
    %v49 = vmul.f32 %v33, -0.0234375
    %v50 = vmul.f32 %v34, -0.0234375
    %v51 = vmul.f32 %v35, -0.0234375
    %v52 = vmul.f32 %v36, -0.0234375
    %v53 = vmul.f32 %v37, -0.0234375
    %v54 = vmul.f32 %v38, -0.0234375
    %v55 = vmul.f32 %v39, -0.0234375
    %v56 = vmul.f32 %v24, 0.2265625
    %v57 = vmul.f32 %v25, 0.2265625
    %v58 = vmul.f32 %v26, 0.2265625
    %v59 = vmul.f32 %v27, 0.2265625
    %v60 = vmul.f32 %v28, 0.2265625
    %v61 = vmul.f32 %v29, 0.2265625
    %v62 = vmul.f32 %v30, 0.2265625
    %v63 = vmul.f32 %v31, 0.2265625
    %v64 = vmul.f32 %v32, 0.2265625
    %v65 = vmul.f32 %v33, 0.2265625
    %v66 = vmul.f32 %v34, 0.2265625
    %v67 = vmul.f32 %v35, 0.2265625
    %v68 = vmul.f32 %v36, 0.2265625
    %v69 = vmul.f32 %v37, 0.2265625
    %v70 = vmul.f32 %v38, 0.2265625
    %v71 = vmul.f32 %v39, 0.2265625
    %88 = vrot.lane.b32.xlu0 %v56, 127
    %v89 = vpop.permute.xlu0 %88
    %90 = vrot.lane.b32.xlu0 %v57, 127
    %v91 = vpop.permute.xlu0 %90
    %92 = vrot.lane.b32.xlu0 %v58, 127
    %v93 = vpop.permute.xlu0 %92
    %94 = vrot.lane.b32.xlu0 %v59, 127
    %v95 = vpop.permute.xlu0 %94
    %96 = vrot.lane.b32.xlu0 %v60, 127
    %v97 = vpop.permute.xlu0 %96
    %98 = vrot.lane.b32.xlu0 %v61, 127
    %v99 = vpop.permute.xlu0 %98
    %100 = vrot.lane.b32.xlu0 %v62, 127
    %v101 = vpop.permute.xlu0 %100
    %102 = vrot.lane.b32.xlu0 %v63, 127
    %v103 = vpop.permute.xlu0 %102
    %104 = vrot.lane.b32.xlu0 %v64, 127
    %v105 = vpop.permute.xlu0 %104
    %106 = vrot.lane.b32.xlu0 %v65, 127
    %v107 = vpop.permute.xlu0 %106
    %108 = vrot.lane.b32.xlu0 %v66, 127
    %v109 = vpop.permute.xlu0 %108
    %110 = vrot.lane.b32.xlu0 %v67, 127
    %v111 = vpop.permute.xlu0 %110
    %112 = vrot.lane.b32.xlu0 %v68, 127
    %v113 = vpop.permute.xlu0 %112
    %114 = vrot.lane.b32.xlu0 %v69, 127
    %v115 = vpop.permute.xlu0 %114
    %116 = vrot.lane.b32.xlu0 %v70, 127
    %v117 = vpop.permute.xlu0 %116
    %118 = vrot.lane.b32.xlu0 %v71, 127
    %v119 = vpop.permute.xlu0 %118
    %v136 = vadd.f32 %v40, %v89
    %v137 = vadd.f32 %v41, %v91
    %v138 = vadd.f32 %v42, %v93
    %v139 = vadd.f32 %v43, %v95
    %v140 = vadd.f32 %v44, %v97
    %v141 = vadd.f32 %v45, %v99
    %v142 = vadd.f32 %v46, %v101
    %v143 = vadd.f32 %v47, %v103
    %v144 = vadd.f32 %v48, %v105
    %v145 = vadd.f32 %v49, %v107
    %v146 = vadd.f32 %v50, %v109
    %v147 = vadd.f32 %v51, %v111
    %v148 = vadd.f32 %v52, %v113
    %v149 = vadd.f32 %v53, %v115
    %v150 = vadd.f32 %v54, %v117
    %v151 = vadd.f32 %v55, %v119
    %v152 = vmul.f32 %v24, 0.8671875
    %v153 = vmul.f32 %v25, 0.8671875
    %v154 = vmul.f32 %v26, 0.8671875
    %v155 = vmul.f32 %v27, 0.8671875
    %v156 = vmul.f32 %v28, 0.8671875
    %v157 = vmul.f32 %v29, 0.8671875
    %v158 = vmul.f32 %v30, 0.8671875
    %v159 = vmul.f32 %v31, 0.8671875
    %v160 = vmul.f32 %v32, 0.8671875
    %v161 = vmul.f32 %v33, 0.8671875
    %v162 = vmul.f32 %v34, 0.8671875
    %v163 = vmul.f32 %v35, 0.8671875
    %v164 = vmul.f32 %v36, 0.8671875
    %v165 = vmul.f32 %v37, 0.8671875
    %v166 = vmul.f32 %v38, 0.8671875
    %v167 = vmul.f32 %v39, 0.8671875
    %184 = vrot.lane.b32.xlu0 %v152, 126
    %v185 = vpop.permute.xlu0 %184
    %186 = vrot.lane.b32.xlu0 %v153, 126
    %v187 = vpop.permute.xlu0 %186
    %188 = vrot.lane.b32.xlu0 %v154, 126
    %v189 = vpop.permute.xlu0 %188
    %190 = vrot.lane.b32.xlu0 %v155, 126
    %v191 = vpop.permute.xlu0 %190
    %192 = vrot.lane.b32.xlu0 %v156, 126
    %v193 = vpop.permute.xlu0 %192
    %194 = vrot.lane.b32.xlu0 %v157, 126
    %v195 = vpop.permute.xlu0 %194
    %196 = vrot.lane.b32.xlu0 %v158, 126
    %v197 = vpop.permute.xlu0 %196
    %198 = vrot.lane.b32.xlu0 %v159, 126
    %v199 = vpop.permute.xlu0 %198
    %200 = vrot.lane.b32.xlu0 %v160, 126
    %v201 = vpop.permute.xlu0 %200
    %202 = vrot.lane.b32.xlu0 %v161, 126
    %v203 = vpop.permute.xlu0 %202
    %204 = vrot.lane.b32.xlu0 %v162, 126
    %v205 = vpop.permute.xlu0 %204
    %206 = vrot.lane.b32.xlu0 %v163, 126
    %v207 = vpop.permute.xlu0 %206
    %208 = vrot.lane.b32.xlu0 %v164, 126
    %v209 = vpop.permute.xlu0 %208
    %210 = vrot.lane.b32.xlu0 %v165, 126
    %v211 = vpop.permute.xlu0 %210
    %212 = vrot.lane.b32.xlu0 %v166, 126
    %v213 = vpop.permute.xlu0 %212
    %214 = vrot.lane.b32.xlu0 %v167, 126
    %v215 = vpop.permute.xlu0 %214
    %v232 = vadd.f32 %v136, %v185
    %v233 = vadd.f32 %v137, %v187
    %v234 = vadd.f32 %v138, %v189
    %v235 = vadd.f32 %v139, %v191
    %v236 = vadd.f32 %v140, %v193
    %v237 = vadd.f32 %v141, %v195
    %v238 = vadd.f32 %v142, %v197
    %v239 = vadd.f32 %v143, %v199
    %v240 = vadd.f32 %v144, %v201
    %v241 = vadd.f32 %v145, %v203
    %v242 = vadd.f32 %v146, %v205
    %v243 = vadd.f32 %v147, %v207
    %v244 = vadd.f32 %v148, %v209
    %v245 = vadd.f32 %v149, %v211
    %v246 = vadd.f32 %v150, %v213
    %v247 = vadd.f32 %v151, %v215
    %v248 = vmul.f32 %v24, -0.0703125
    %v249 = vmul.f32 %v25, -0.0703125
    %v250 = vmul.f32 %v26, -0.0703125
    %v251 = vmul.f32 %v27, -0.0703125
    %v252 = vmul.f32 %v28, -0.0703125
    %v253 = vmul.f32 %v29, -0.0703125
    %v254 = vmul.f32 %v30, -0.0703125
    %v255 = vmul.f32 %v31, -0.0703125
    %v256 = vmul.f32 %v32, -0.0703125
    %v257 = vmul.f32 %v33, -0.0703125
    %v258 = vmul.f32 %v34, -0.0703125
    %v259 = vmul.f32 %v35, -0.0703125
    %v260 = vmul.f32 %v36, -0.0703125
    %v261 = vmul.f32 %v37, -0.0703125
    %v262 = vmul.f32 %v38, -0.0703125
    %v263 = vmul.f32 %v39, -0.0703125
    %280 = vrot.lane.b32.xlu0 %v248, 125
    %v281 = vpop.permute.xlu0 %280
    %282 = vrot.lane.b32.xlu0 %v249, 125
    %v283 = vpop.permute.xlu0 %282
    %284 = vrot.lane.b32.xlu0 %v250, 125
    %v285 = vpop.permute.xlu0 %284
    %286 = vrot.lane.b32.xlu0 %v251, 125
    %v287 = vpop.permute.xlu0 %286
    %288 = vrot.lane.b32.xlu0 %v252, 125
    %v289 = vpop.permute.xlu0 %288
    %290 = vrot.lane.b32.xlu0 %v253, 125
    %v291 = vpop.permute.xlu0 %290
    %292 = vrot.lane.b32.xlu0 %v254, 125
    %v293 = vpop.permute.xlu0 %292
    %294 = vrot.lane.b32.xlu0 %v255, 125
    %v295 = vpop.permute.xlu0 %294
    %296 = vrot.lane.b32.xlu0 %v256, 125
    %v297 = vpop.permute.xlu0 %296
    %298 = vrot.lane.b32.xlu0 %v257, 125
    %v299 = vpop.permute.xlu0 %298
    %300 = vrot.lane.b32.xlu0 %v258, 125
    %v301 = vpop.permute.xlu0 %300
    %302 = vrot.lane.b32.xlu0 %v259, 125
    %v303 = vpop.permute.xlu0 %302
    %304 = vrot.lane.b32.xlu0 %v260, 125
    %v305 = vpop.permute.xlu0 %304
    %306 = vrot.lane.b32.xlu0 %v261, 125
    %v307 = vpop.permute.xlu0 %306
    %308 = vrot.lane.b32.xlu0 %v262, 125
    %v309 = vpop.permute.xlu0 %308
    %310 = vrot.lane.b32.xlu0 %v263, 125
    %v311 = vpop.permute.xlu0 %310
    %v328 = vadd.f32 %v232, %v281
    %v329 = vadd.f32 %v233, %v283
    %v330 = vadd.f32 %v234, %v285
    %v331 = vadd.f32 %v235, %v287
    %v332 = vadd.f32 %v236, %v289
    %v333 = vadd.f32 %v237, %v291
    %v334 = vadd.f32 %v238, %v293
    %v335 = vadd.f32 %v239, %v295
    %v336 = vadd.f32 %v240, %v297
    %v337 = vadd.f32 %v241, %v299
    %v338 = vadd.f32 %v242, %v301
    %v339 = vadd.f32 %v243, %v303
    %v340 = vadd.f32 %v244, %v305
    %v341 = vadd.f32 %v245, %v307
    %v342 = vadd.f32 %v246, %v309
    %v343 = vadd.f32 %v247, %v311
    %v344 = vmul.f32 %v328, -0.0234375
    %v345 = vmul.f32 %v329, -0.0234375
    %v346 = vmul.f32 %v330, -0.0234375
    %v347 = vmul.f32 %v331, -0.0234375
    %v348 = vmul.f32 %v332, -0.0234375
    %v349 = vmul.f32 %v333, -0.0234375
    %v350 = vmul.f32 %v334, -0.0234375
    %v351 = vmul.f32 %v335, -0.0234375
    %v352 = vmul.f32 %v336, -0.0234375
    %v353 = vmul.f32 %v337, -0.0234375
    %v354 = vmul.f32 %v338, -0.0234375
    %v355 = vmul.f32 %v339, -0.0234375
    %v356 = vmul.f32 %v340, -0.0234375
    %v357 = vmul.f32 %v341, -0.0234375
    %v358 = vmul.f32 %v342, -0.0234375
    %v359 = vmul.f32 %v343, -0.0234375
    %v360 = vmul.f32 %v328, 0.2265625
    %v361 = vmul.f32 %v329, 0.2265625
    %v362 = vmul.f32 %v330, 0.2265625
    %v363 = vmul.f32 %v331, 0.2265625
    %v364 = vmul.f32 %v332, 0.2265625
    %v365 = vmul.f32 %v333, 0.2265625
    %v366 = vmul.f32 %v334, 0.2265625
    %v367 = vmul.f32 %v335, 0.2265625
    %v368 = vmul.f32 %v336, 0.2265625
    %v369 = vmul.f32 %v337, 0.2265625
    %v370 = vmul.f32 %v338, 0.2265625
    %v371 = vmul.f32 %v339, 0.2265625
    %v372 = vmul.f32 %v340, 0.2265625
    %v373 = vmul.f32 %v341, 0.2265625
    %v374 = vmul.f32 %v342, 0.2265625
    %v375 = vmul.f32 %v343, 0.2265625
    %vm392 = vcmask 1046528
    %v393 = vrot.slane %v360, 1
    %v394 = vrot.slane %v361, 1
    %v395 = vsel %vm392, %v393, %v394
    %v396 = vrot.slane %v362, 1
    %v397 = vrot.slane %v363, 1
    %v398 = vsel %vm392, %v396, %v397
    %v399 = vrot.slane %v364, 1
    %v400 = vrot.slane %v365, 1
    %v401 = vsel %vm392, %v399, %v400
    %v402 = vrot.slane %v366, 1
    %v403 = vrot.slane %v367, 1
    %v404 = vsel %vm392, %v402, %v403
    %v405 = vrot.slane %v368, 1
    %v406 = vrot.slane %v369, 1
    %v407 = vsel %vm392, %v405, %v406
    %v408 = vrot.slane %v370, 1
    %v409 = vrot.slane %v371, 1
    %v410 = vsel %vm392, %v408, %v409
    %v411 = vrot.slane %v372, 1
    %v412 = vrot.slane %v373, 1
    %v413 = vsel %vm392, %v411, %v412
    %v414 = vrot.slane %v374, 1
    %v415 = vrot.slane %v375, 1
    %v416 = vsel %vm392, %v414, %v415
    %v433 = vadd.f32 %v344, %v395
    %v434 = vadd.f32 %v345, %v394
    %v435 = vadd.f32 %v346, %v398
    %v436 = vadd.f32 %v347, %v397
    %v437 = vadd.f32 %v348, %v401
    %v438 = vadd.f32 %v349, %v400
    %v439 = vadd.f32 %v350, %v404
    %v440 = vadd.f32 %v351, %v403
    %v441 = vadd.f32 %v352, %v407
    %v442 = vadd.f32 %v353, %v406
    %v443 = vadd.f32 %v354, %v410
    %v444 = vadd.f32 %v355, %v409
    %v445 = vadd.f32 %v356, %v413
    %v446 = vadd.f32 %v357, %v412
    %v447 = vadd.f32 %v358, %v416
    %v448 = vadd.f32 %v359, %v415
    %v449 = vmul.f32 %v328, 0.8671875
    %v450 = vmul.f32 %v329, 0.8671875
    %v451 = vmul.f32 %v330, 0.8671875
    %v452 = vmul.f32 %v331, 0.8671875
    %v453 = vmul.f32 %v332, 0.8671875
    %v454 = vmul.f32 %v333, 0.8671875
    %v455 = vmul.f32 %v334, 0.8671875
    %v456 = vmul.f32 %v335, 0.8671875
    %v457 = vmul.f32 %v336, 0.8671875
    %v458 = vmul.f32 %v337, 0.8671875
    %v459 = vmul.f32 %v338, 0.8671875
    %v460 = vmul.f32 %v339, 0.8671875
    %v461 = vmul.f32 %v340, 0.8671875
    %v462 = vmul.f32 %v341, 0.8671875
    %v463 = vmul.f32 %v342, 0.8671875
    %v464 = vmul.f32 %v343, 0.8671875
    %vm481 = vcmask 1045504
    %v482 = vrot.slane %v449, 2
    %v483 = vrot.slane %v450, 2
    %v484 = vsel %vm481, %v482, %v483
    %v485 = vrot.slane %v451, 2
    %v486 = vrot.slane %v452, 2
    %v487 = vsel %vm481, %v485, %v486
    %v488 = vrot.slane %v453, 2
    %v489 = vrot.slane %v454, 2
    %v490 = vsel %vm481, %v488, %v489
    %v491 = vrot.slane %v455, 2
    %v492 = vrot.slane %v456, 2
    %v493 = vsel %vm481, %v491, %v492
    %v494 = vrot.slane %v457, 2
    %v495 = vrot.slane %v458, 2
    %v496 = vsel %vm481, %v494, %v495
    %v497 = vrot.slane %v459, 2
    %v498 = vrot.slane %v460, 2
    %v499 = vsel %vm481, %v497, %v498
    %v500 = vrot.slane %v461, 2
    %v501 = vrot.slane %v462, 2
    %v502 = vsel %vm481, %v500, %v501
    %v503 = vrot.slane %v463, 2
    %v504 = vrot.slane %v464, 2
    %v505 = vsel %vm481, %v503, %v504
    %v522 = vadd.f32 %v433, %v484
    %v523 = vadd.f32 %v434, %v483
    %v524 = vadd.f32 %v435, %v487
    %v525 = vadd.f32 %v436, %v486
    %v526 = vadd.f32 %v437, %v490
    %v527 = vadd.f32 %v438, %v489
    %v528 = vadd.f32 %v439, %v493
    %v529 = vadd.f32 %v440, %v492
    %v530 = vadd.f32 %v441, %v496
    %v531 = vadd.f32 %v442, %v495
    %v532 = vadd.f32 %v443, %v499
    %v533 = vadd.f32 %v444, %v498
    %v534 = vadd.f32 %v445, %v502
    %v535 = vadd.f32 %v446, %v501
    %v536 = vadd.f32 %v447, %v505
    %v537 = vadd.f32 %v448, %v504
    %v538 = vmul.f32 %v328, -0.0703125
    %v539 = vmul.f32 %v329, -0.0703125
    %v540 = vmul.f32 %v330, -0.0703125
    %v541 = vmul.f32 %v331, -0.0703125
    %v542 = vmul.f32 %v332, -0.0703125
    %v543 = vmul.f32 %v333, -0.0703125
    %v544 = vmul.f32 %v334, -0.0703125
    %v545 = vmul.f32 %v335, -0.0703125
    %v546 = vmul.f32 %v336, -0.0703125
    %v547 = vmul.f32 %v337, -0.0703125
    %v548 = vmul.f32 %v338, -0.0703125
    %v549 = vmul.f32 %v339, -0.0703125
    %v550 = vmul.f32 %v340, -0.0703125
    %v551 = vmul.f32 %v341, -0.0703125
    %v552 = vmul.f32 %v342, -0.0703125
    %v553 = vmul.f32 %v343, -0.0703125
    %vm570 = vcmask 1044480
    %v571 = vrot.slane %v538, 3
    %v572 = vrot.slane %v539, 3
    %v573 = vsel %vm570, %v571, %v572
    %v574 = vrot.slane %v540, 3
    %v575 = vrot.slane %v541, 3
    %v576 = vsel %vm570, %v574, %v575
    %v577 = vrot.slane %v542, 3
    %v578 = vrot.slane %v543, 3
    %v579 = vsel %vm570, %v577, %v578
    %v580 = vrot.slane %v544, 3
    %v581 = vrot.slane %v545, 3
    %v582 = vsel %vm570, %v580, %v581
    %v583 = vrot.slane %v546, 3
    %v584 = vrot.slane %v547, 3
    %v585 = vsel %vm570, %v583, %v584
    %v586 = vrot.slane %v548, 3
    %v587 = vrot.slane %v549, 3
    %v588 = vsel %vm570, %v586, %v587
    %v589 = vrot.slane %v550, 3
    %v590 = vrot.slane %v551, 3
    %v591 = vsel %vm570, %v589, %v590
    %v592 = vrot.slane %v552, 3
    %v593 = vrot.slane %v553, 3
    %v594 = vsel %vm570, %v592, %v593
    %v611 = vadd.f32 %v522, %v573
    %v612 = vadd.f32 %v523, %v572
    %v613 = vadd.f32 %v524, %v576
    %v614 = vadd.f32 %v525, %v575
    %v615 = vadd.f32 %v526, %v579
    %v616 = vadd.f32 %v527, %v578
    %v617 = vadd.f32 %v528, %v582
    %v618 = vadd.f32 %v529, %v581
    %v619 = vadd.f32 %v530, %v585
    %v620 = vadd.f32 %v531, %v584
    %v621 = vadd.f32 %v532, %v588
    %v622 = vadd.f32 %v533, %v587
    %v623 = vadd.f32 %v534, %v591
    %v624 = vadd.f32 %v535, %v590
    %v625 = vadd.f32 %v536, %v594
    %v626 = vadd.f32 %v537, %v593
    %s627 = scalar_lea.vmem %s1, 48
    %vm628 = vcmask 105472
    %629 = vst.msk [vmem:[%s627] sm:$0xff] %vm628, %v611
    %vm630 = vcmask 102400
    %631 = vst.msk [vmem:[%s627 + $0x8] sm:$0x1f] %vm630, %v612
    %632 = vst.msk [vmem:[%s627 + $0x40] sm:$0xff] %vm628, %v613
    %633 = vst.msk [vmem:[%s627 + $0x48] sm:$0x1f] %vm630, %v614
    %634 = vst.msk [vmem:[%s627 + $0x80] sm:$0xff] %vm628, %v615
    %635 = vst.msk [vmem:[%s627 + $0x88] sm:$0x1f] %vm630, %v616
    %636 = vst.msk [vmem:[%s627 + $0xc0] sm:$0xff] %vm628, %v617
    %637 = vst.msk [vmem:[%s627 + $0xc8] sm:$0x1f] %vm630, %v618
    %638 = vst.msk [vmem:[%s627 + $0x100] sm:$0xff] %vm628, %v619
    %639 = vst.msk [vmem:[%s627 + $0x108] sm:$0x1f] %vm630, %v620
    %640 = vst.msk [vmem:[%s627 + $0x140] sm:$0xff] %vm628, %v621
    %641 = vst.msk [vmem:[%s627 + $0x148] sm:$0x1f] %vm630, %v622
    %642 = vst.msk [vmem:[%s627 + $0x180] sm:$0xff] %vm628, %v623
    %643 = vst.msk [vmem:[%s627 + $0x188] sm:$0x1f] %vm630, %v624
    %644 = vst.msk [vmem:[%s627 + $0x1c0] sm:$0xff] %vm628, %v625
    %645 = vst.msk [vmem:[%s627 + $0x1c8] sm:$0x1f] %vm630, %v626
    %v646 = vrot.slane %v449, 1
    %v647 = vrot.slane %v450, 1
    %v648 = vsel %vm392, %v646, %v647
    %v649 = vrot.slane %v451, 1
    %v650 = vrot.slane %v452, 1
    %v651 = vsel %vm392, %v649, %v650
    %v652 = vrot.slane %v453, 1
    %v653 = vrot.slane %v454, 1
    %v654 = vsel %vm392, %v652, %v653
    %v655 = vrot.slane %v455, 1
    %v656 = vrot.slane %v456, 1
    %v657 = vsel %vm392, %v655, %v656
    %v658 = vrot.slane %v457, 1
    %v659 = vrot.slane %v458, 1
    %v660 = vsel %vm392, %v658, %v659
    %v661 = vrot.slane %v459, 1
    %v662 = vrot.slane %v460, 1
    %v663 = vsel %vm392, %v661, %v662
    %v664 = vrot.slane %v461, 1
    %v665 = vrot.slane %v462, 1
    %v666 = vsel %vm392, %v664, %v665
    %v667 = vrot.slane %v463, 1
    %v668 = vrot.slane %v464, 1
    %v669 = vsel %vm392, %v667, %v668
    %v686 = vadd.f32 %v538, %v648
    %v687 = vadd.f32 %v539, %v647
    %v688 = vadd.f32 %v540, %v651
    %v689 = vadd.f32 %v541, %v650
    %v690 = vadd.f32 %v542, %v654
    %v691 = vadd.f32 %v543, %v653
    %v692 = vadd.f32 %v544, %v657
    %v693 = vadd.f32 %v545, %v656
    %v694 = vadd.f32 %v546, %v660
    %v695 = vadd.f32 %v547, %v659
    %v696 = vadd.f32 %v548, %v663
    %v697 = vadd.f32 %v549, %v662
    %v698 = vadd.f32 %v550, %v666
    %v699 = vadd.f32 %v551, %v665
    %v700 = vadd.f32 %v552, %v669
    %v701 = vadd.f32 %v553, %v668
    %v702 = vrot.slane %v360, 2
    %v703 = vrot.slane %v361, 2
    %v704 = vsel %vm481, %v702, %v703
    %v705 = vrot.slane %v362, 2
    %v706 = vrot.slane %v363, 2
    %v707 = vsel %vm481, %v705, %v706
    %v708 = vrot.slane %v364, 2
    %v709 = vrot.slane %v365, 2
    %v710 = vsel %vm481, %v708, %v709
    %v711 = vrot.slane %v366, 2
    %v712 = vrot.slane %v367, 2
    %v713 = vsel %vm481, %v711, %v712
    %v714 = vrot.slane %v368, 2
    %v715 = vrot.slane %v369, 2
    %v716 = vsel %vm481, %v714, %v715
    %v717 = vrot.slane %v370, 2
    %v718 = vrot.slane %v371, 2
    %v719 = vsel %vm481, %v717, %v718
    %v720 = vrot.slane %v372, 2
    %v721 = vrot.slane %v373, 2
    %v722 = vsel %vm481, %v720, %v721
    %v723 = vrot.slane %v374, 2
    %v724 = vrot.slane %v375, 2
    %v725 = vsel %vm481, %v723, %v724
    %v742 = vadd.f32 %v686, %v704
    %v743 = vadd.f32 %v687, %v703
    %v744 = vadd.f32 %v688, %v707
    %v745 = vadd.f32 %v689, %v706
    %v746 = vadd.f32 %v690, %v710
    %v747 = vadd.f32 %v691, %v709
    %v748 = vadd.f32 %v692, %v713
    %v749 = vadd.f32 %v693, %v712
    %v750 = vadd.f32 %v694, %v716
    %v751 = vadd.f32 %v695, %v715
    %v752 = vadd.f32 %v696, %v719
    %v753 = vadd.f32 %v697, %v718
    %v754 = vadd.f32 %v698, %v722
    %v755 = vadd.f32 %v699, %v721
    %v756 = vadd.f32 %v700, %v725
    %v757 = vadd.f32 %v701, %v724
    %v774 = vrot.slane %v344, 3
    %v775 = vrot.slane %v345, 3
    %v776 = vsel %vm570, %v774, %v775
    %v777 = vrot.slane %v346, 3
    %v778 = vrot.slane %v347, 3
    %v779 = vsel %vm570, %v777, %v778
    %v780 = vrot.slane %v348, 3
    %v781 = vrot.slane %v349, 3
    %v782 = vsel %vm570, %v780, %v781
    %v783 = vrot.slane %v350, 3
    %v784 = vrot.slane %v351, 3
    %v785 = vsel %vm570, %v783, %v784
    %v786 = vrot.slane %v352, 3
    %v787 = vrot.slane %v353, 3
    %v788 = vsel %vm570, %v786, %v787
    %v789 = vrot.slane %v354, 3
    %v790 = vrot.slane %v355, 3
    %v791 = vsel %vm570, %v789, %v790
    %v792 = vrot.slane %v356, 3
    %v793 = vrot.slane %v357, 3
    %v794 = vsel %vm570, %v792, %v793
    %v795 = vrot.slane %v358, 3
    %v796 = vrot.slane %v359, 3
    %v797 = vsel %vm570, %v795, %v796
    %v814 = vadd.f32 %v742, %v776
    %v815 = vadd.f32 %v743, %v775
    %v816 = vadd.f32 %v744, %v779
    %v817 = vadd.f32 %v745, %v778
    %v818 = vadd.f32 %v746, %v782
    %v819 = vadd.f32 %v747, %v781
    %v820 = vadd.f32 %v748, %v785
    %v821 = vadd.f32 %v749, %v784
    %v822 = vadd.f32 %v750, %v788
    %v823 = vadd.f32 %v751, %v787
    %v824 = vadd.f32 %v752, %v791
    %v825 = vadd.f32 %v753, %v790
    %v826 = vadd.f32 %v754, %v794
    %v827 = vadd.f32 %v755, %v793
    %v828 = vadd.f32 %v756, %v797
    %v829 = vadd.f32 %v757, %v796
    %s830 = scalar_lea.vmem %s1, 16
    %831 = vst.msk [vmem:[%s830] sm:$0xff] %vm628, %v814
    %832 = vst.msk [vmem:[%s830 + $0x8] sm:$0x1f] %vm630, %v815
    %833 = vst.msk [vmem:[%s830 + $0x40] sm:$0xff] %vm628, %v816
    %834 = vst.msk [vmem:[%s830 + $0x48] sm:$0x1f] %vm630, %v817
    %835 = vst.msk [vmem:[%s830 + $0x80] sm:$0xff] %vm628, %v818
    %836 = vst.msk [vmem:[%s830 + $0x88] sm:$0x1f] %vm630, %v819
    %837 = vst.msk [vmem:[%s830 + $0xc0] sm:$0xff] %vm628, %v820
    %838 = vst.msk [vmem:[%s830 + $0xc8] sm:$0x1f] %vm630, %v821
    %839 = vst.msk [vmem:[%s830 + $0x100] sm:$0xff] %vm628, %v822
    %840 = vst.msk [vmem:[%s830 + $0x108] sm:$0x1f] %vm630, %v823
    %841 = vst.msk [vmem:[%s830 + $0x140] sm:$0xff] %vm628, %v824
    %842 = vst.msk [vmem:[%s830 + $0x148] sm:$0x1f] %vm630, %v825
    %843 = vst.msk [vmem:[%s830 + $0x180] sm:$0xff] %vm628, %v826
    %844 = vst.msk [vmem:[%s830 + $0x188] sm:$0x1f] %vm630, %v827
    %845 = vst.msk [vmem:[%s830 + $0x1c0] sm:$0xff] %vm628, %v828
    %846 = vst.msk [vmem:[%s830 + $0x1c8] sm:$0x1f] %vm630, %v829
    %847 = vrot.lane.b32.xlu0 %v152, 127
    %v848 = vpop.permute.xlu0 %847
    %849 = vrot.lane.b32.xlu0 %v153, 127
    %v850 = vpop.permute.xlu0 %849
    %851 = vrot.lane.b32.xlu0 %v154, 127
    %v852 = vpop.permute.xlu0 %851
    %853 = vrot.lane.b32.xlu0 %v155, 127
    %v854 = vpop.permute.xlu0 %853
    %855 = vrot.lane.b32.xlu0 %v156, 127
    %v856 = vpop.permute.xlu0 %855
    %857 = vrot.lane.b32.xlu0 %v157, 127
    %v858 = vpop.permute.xlu0 %857
    %859 = vrot.lane.b32.xlu0 %v158, 127
    %v860 = vpop.permute.xlu0 %859
    %861 = vrot.lane.b32.xlu0 %v159, 127
    %v862 = vpop.permute.xlu0 %861
    %863 = vrot.lane.b32.xlu0 %v160, 127
    %v864 = vpop.permute.xlu0 %863
    %865 = vrot.lane.b32.xlu0 %v161, 127
    %v866 = vpop.permute.xlu0 %865
    %867 = vrot.lane.b32.xlu0 %v162, 127
    %v868 = vpop.permute.xlu0 %867
    %869 = vrot.lane.b32.xlu0 %v163, 127
    %v870 = vpop.permute.xlu0 %869
    %871 = vrot.lane.b32.xlu0 %v164, 127
    %v872 = vpop.permute.xlu0 %871
    %873 = vrot.lane.b32.xlu0 %v165, 127
    %v874 = vpop.permute.xlu0 %873
    %875 = vrot.lane.b32.xlu0 %v166, 127
    %v876 = vpop.permute.xlu0 %875
    %877 = vrot.lane.b32.xlu0 %v167, 127
    %v878 = vpop.permute.xlu0 %877
    %v895 = vadd.f32 %v248, %v848
    %v896 = vadd.f32 %v249, %v850
    %v897 = vadd.f32 %v250, %v852
    %v898 = vadd.f32 %v251, %v854
    %v899 = vadd.f32 %v252, %v856
    %v900 = vadd.f32 %v253, %v858
    %v901 = vadd.f32 %v254, %v860
    %v902 = vadd.f32 %v255, %v862
    %v903 = vadd.f32 %v256, %v864
    %v904 = vadd.f32 %v257, %v866
    %v905 = vadd.f32 %v258, %v868
    %v906 = vadd.f32 %v259, %v870
    %v907 = vadd.f32 %v260, %v872
    %v908 = vadd.f32 %v261, %v874
    %v909 = vadd.f32 %v262, %v876
    %v910 = vadd.f32 %v263, %v878
    %911 = vrot.lane.b32.xlu0 %v56, 126
    %v912 = vpop.permute.xlu0 %911
    %913 = vrot.lane.b32.xlu0 %v57, 126
    %v914 = vpop.permute.xlu0 %913
    %915 = vrot.lane.b32.xlu0 %v58, 126
    %v916 = vpop.permute.xlu0 %915
    %917 = vrot.lane.b32.xlu0 %v59, 126
    %v918 = vpop.permute.xlu0 %917
    %919 = vrot.lane.b32.xlu0 %v60, 126
    %v920 = vpop.permute.xlu0 %919
    %921 = vrot.lane.b32.xlu0 %v61, 126
    %v922 = vpop.permute.xlu0 %921
    %923 = vrot.lane.b32.xlu0 %v62, 126
    %v924 = vpop.permute.xlu0 %923
    %925 = vrot.lane.b32.xlu0 %v63, 126
    %v926 = vpop.permute.xlu0 %925
    %927 = vrot.lane.b32.xlu0 %v64, 126
    %v928 = vpop.permute.xlu0 %927
    %929 = vrot.lane.b32.xlu0 %v65, 126
    %v930 = vpop.permute.xlu0 %929
    %931 = vrot.lane.b32.xlu0 %v66, 126
    %v932 = vpop.permute.xlu0 %931
    %933 = vrot.lane.b32.xlu0 %v67, 126
    %v934 = vpop.permute.xlu0 %933
    %935 = vrot.lane.b32.xlu0 %v68, 126
    %v936 = vpop.permute.xlu0 %935
    %937 = vrot.lane.b32.xlu0 %v69, 126
    %v938 = vpop.permute.xlu0 %937
    %939 = vrot.lane.b32.xlu0 %v70, 126
    %v940 = vpop.permute.xlu0 %939
    %941 = vrot.lane.b32.xlu0 %v71, 126
    %v942 = vpop.permute.xlu0 %941
    %v959 = vadd.f32 %v895, %v912
    %v960 = vadd.f32 %v896, %v914
    %v961 = vadd.f32 %v897, %v916
    %v962 = vadd.f32 %v898, %v918
    %v963 = vadd.f32 %v899, %v920
    %v964 = vadd.f32 %v900, %v922
    %v965 = vadd.f32 %v901, %v924
    %v966 = vadd.f32 %v902, %v926
    %v967 = vadd.f32 %v903, %v928
    %v968 = vadd.f32 %v904, %v930
    %v969 = vadd.f32 %v905, %v932
    %v970 = vadd.f32 %v906, %v934
    %v971 = vadd.f32 %v907, %v936
    %v972 = vadd.f32 %v908, %v938
    %v973 = vadd.f32 %v909, %v940
    %v974 = vadd.f32 %v910, %v942
    %991 = vrot.lane.b32.xlu0 %v40, 125
    %v992 = vpop.permute.xlu0 %991
    %993 = vrot.lane.b32.xlu0 %v41, 125
    %v994 = vpop.permute.xlu0 %993
    %995 = vrot.lane.b32.xlu0 %v42, 125
    %v996 = vpop.permute.xlu0 %995
    %997 = vrot.lane.b32.xlu0 %v43, 125
    %v998 = vpop.permute.xlu0 %997
    %999 = vrot.lane.b32.xlu0 %v44, 125
    %v1000 = vpop.permute.xlu0 %999
    %1001 = vrot.lane.b32.xlu0 %v45, 125
    %v1002 = vpop.permute.xlu0 %1001
    %1003 = vrot.lane.b32.xlu0 %v46, 125
    %v1004 = vpop.permute.xlu0 %1003
    %1005 = vrot.lane.b32.xlu0 %v47, 125
    %v1006 = vpop.permute.xlu0 %1005
    %1007 = vrot.lane.b32.xlu0 %v48, 125
    %v1008 = vpop.permute.xlu0 %1007
    %1009 = vrot.lane.b32.xlu0 %v49, 125
    %v1010 = vpop.permute.xlu0 %1009
    %1011 = vrot.lane.b32.xlu0 %v50, 125
    %v1012 = vpop.permute.xlu0 %1011
    %1013 = vrot.lane.b32.xlu0 %v51, 125
    %v1014 = vpop.permute.xlu0 %1013
    %1015 = vrot.lane.b32.xlu0 %v52, 125
    %v1016 = vpop.permute.xlu0 %1015
    %1017 = vrot.lane.b32.xlu0 %v53, 125
    %v1018 = vpop.permute.xlu0 %1017
    %1019 = vrot.lane.b32.xlu0 %v54, 125
    %v1020 = vpop.permute.xlu0 %1019
    %1021 = vrot.lane.b32.xlu0 %v55, 125
    %v1022 = vpop.permute.xlu0 %1021
    %v1039 = vadd.f32 %v959, %v992
    %v1040 = vadd.f32 %v960, %v994
    %v1041 = vadd.f32 %v961, %v996
    %v1042 = vadd.f32 %v962, %v998
    %v1043 = vadd.f32 %v963, %v1000
    %v1044 = vadd.f32 %v964, %v1002
    %v1045 = vadd.f32 %v965, %v1004
    %v1046 = vadd.f32 %v966, %v1006
    %v1047 = vadd.f32 %v967, %v1008
    %v1048 = vadd.f32 %v968, %v1010
    %v1049 = vadd.f32 %v969, %v1012
    %v1050 = vadd.f32 %v970, %v1014
    %v1051 = vadd.f32 %v971, %v1016
    %v1052 = vadd.f32 %v972, %v1018
    %v1053 = vadd.f32 %v973, %v1020
    %v1054 = vadd.f32 %v974, %v1022
    %v1055 = vmul.f32 %v1039, -0.0234375
    %v1056 = vmul.f32 %v1040, -0.0234375
    %v1057 = vmul.f32 %v1041, -0.0234375
    %v1058 = vmul.f32 %v1042, -0.0234375
    %v1059 = vmul.f32 %v1043, -0.0234375
    %v1060 = vmul.f32 %v1044, -0.0234375
    %v1061 = vmul.f32 %v1045, -0.0234375
    %v1062 = vmul.f32 %v1046, -0.0234375
    %v1063 = vmul.f32 %v1047, -0.0234375
    %v1064 = vmul.f32 %v1048, -0.0234375
    %v1065 = vmul.f32 %v1049, -0.0234375
    %v1066 = vmul.f32 %v1050, -0.0234375
    %v1067 = vmul.f32 %v1051, -0.0234375
    %v1068 = vmul.f32 %v1052, -0.0234375
    %v1069 = vmul.f32 %v1053, -0.0234375
    %v1070 = vmul.f32 %v1054, -0.0234375
    %v1071 = vmul.f32 %v1039, 0.2265625
    %v1072 = vmul.f32 %v1040, 0.2265625
    %v1073 = vmul.f32 %v1041, 0.2265625
    %v1074 = vmul.f32 %v1042, 0.2265625
    %v1075 = vmul.f32 %v1043, 0.2265625
    %v1076 = vmul.f32 %v1044, 0.2265625
    %v1077 = vmul.f32 %v1045, 0.2265625
    %v1078 = vmul.f32 %v1046, 0.2265625
    %v1079 = vmul.f32 %v1047, 0.2265625
    %v1080 = vmul.f32 %v1048, 0.2265625
    %v1081 = vmul.f32 %v1049, 0.2265625
    %v1082 = vmul.f32 %v1050, 0.2265625
    %v1083 = vmul.f32 %v1051, 0.2265625
    %v1084 = vmul.f32 %v1052, 0.2265625
    %v1085 = vmul.f32 %v1053, 0.2265625
    %v1086 = vmul.f32 %v1054, 0.2265625
    %v1103 = vrot.slane %v1071, 1
    %v1104 = vrot.slane %v1072, 1
    %v1105 = vsel %vm392, %v1103, %v1104
    %v1106 = vrot.slane %v1073, 1
    %v1107 = vrot.slane %v1074, 1
    %v1108 = vsel %vm392, %v1106, %v1107
    %v1109 = vrot.slane %v1075, 1
    %v1110 = vrot.slane %v1076, 1
    %v1111 = vsel %vm392, %v1109, %v1110
    %v1112 = vrot.slane %v1077, 1
    %v1113 = vrot.slane %v1078, 1
    %v1114 = vsel %vm392, %v1112, %v1113
    %v1115 = vrot.slane %v1079, 1
    %v1116 = vrot.slane %v1080, 1
    %v1117 = vsel %vm392, %v1115, %v1116
    %v1118 = vrot.slane %v1081, 1
    %v1119 = vrot.slane %v1082, 1
    %v1120 = vsel %vm392, %v1118, %v1119
    %v1121 = vrot.slane %v1083, 1
    %v1122 = vrot.slane %v1084, 1
    %v1123 = vsel %vm392, %v1121, %v1122
    %v1124 = vrot.slane %v1085, 1
    %v1125 = vrot.slane %v1086, 1
    %v1126 = vsel %vm392, %v1124, %v1125
    %v1143 = vadd.f32 %v1055, %v1105
    %v1144 = vadd.f32 %v1056, %v1104
    %v1145 = vadd.f32 %v1057, %v1108
    %v1146 = vadd.f32 %v1058, %v1107
    %v1147 = vadd.f32 %v1059, %v1111
    %v1148 = vadd.f32 %v1060, %v1110
    %v1149 = vadd.f32 %v1061, %v1114
    %v1150 = vadd.f32 %v1062, %v1113
    %v1151 = vadd.f32 %v1063, %v1117
    %v1152 = vadd.f32 %v1064, %v1116
    %v1153 = vadd.f32 %v1065, %v1120
    %v1154 = vadd.f32 %v1066, %v1119
    %v1155 = vadd.f32 %v1067, %v1123
    %v1156 = vadd.f32 %v1068, %v1122
    %v1157 = vadd.f32 %v1069, %v1126
    %v1158 = vadd.f32 %v1070, %v1125
    %v1159 = vmul.f32 %v1039, 0.8671875
    %v1160 = vmul.f32 %v1040, 0.8671875
    %v1161 = vmul.f32 %v1041, 0.8671875
    %v1162 = vmul.f32 %v1042, 0.8671875
    %v1163 = vmul.f32 %v1043, 0.8671875
    %v1164 = vmul.f32 %v1044, 0.8671875
    %v1165 = vmul.f32 %v1045, 0.8671875
    %v1166 = vmul.f32 %v1046, 0.8671875
    %v1167 = vmul.f32 %v1047, 0.8671875
    %v1168 = vmul.f32 %v1048, 0.8671875
    %v1169 = vmul.f32 %v1049, 0.8671875
    %v1170 = vmul.f32 %v1050, 0.8671875
    %v1171 = vmul.f32 %v1051, 0.8671875
    %v1172 = vmul.f32 %v1052, 0.8671875
    %v1173 = vmul.f32 %v1053, 0.8671875
    %v1174 = vmul.f32 %v1054, 0.8671875
    %v1191 = vrot.slane %v1159, 2
    %v1192 = vrot.slane %v1160, 2
    %v1193 = vsel %vm481, %v1191, %v1192
    %v1194 = vrot.slane %v1161, 2
    %v1195 = vrot.slane %v1162, 2
    %v1196 = vsel %vm481, %v1194, %v1195
    %v1197 = vrot.slane %v1163, 2
    %v1198 = vrot.slane %v1164, 2
    %v1199 = vsel %vm481, %v1197, %v1198
    %v1200 = vrot.slane %v1165, 2
    %v1201 = vrot.slane %v1166, 2
    %v1202 = vsel %vm481, %v1200, %v1201
    %v1203 = vrot.slane %v1167, 2
    %v1204 = vrot.slane %v1168, 2
    %v1205 = vsel %vm481, %v1203, %v1204
    %v1206 = vrot.slane %v1169, 2
    %v1207 = vrot.slane %v1170, 2
    %v1208 = vsel %vm481, %v1206, %v1207
    %v1209 = vrot.slane %v1171, 2
    %v1210 = vrot.slane %v1172, 2
    %v1211 = vsel %vm481, %v1209, %v1210
    %v1212 = vrot.slane %v1173, 2
    %v1213 = vrot.slane %v1174, 2
    %v1214 = vsel %vm481, %v1212, %v1213
    %v1231 = vadd.f32 %v1143, %v1193
    %v1232 = vadd.f32 %v1144, %v1192
    %v1233 = vadd.f32 %v1145, %v1196
    %v1234 = vadd.f32 %v1146, %v1195
    %v1235 = vadd.f32 %v1147, %v1199
    %v1236 = vadd.f32 %v1148, %v1198
    %v1237 = vadd.f32 %v1149, %v1202
    %v1238 = vadd.f32 %v1150, %v1201
    %v1239 = vadd.f32 %v1151, %v1205
    %v1240 = vadd.f32 %v1152, %v1204
    %v1241 = vadd.f32 %v1153, %v1208
    %v1242 = vadd.f32 %v1154, %v1207
    %v1243 = vadd.f32 %v1155, %v1211
    %v1244 = vadd.f32 %v1156, %v1210
    %v1245 = vadd.f32 %v1157, %v1214
    %v1246 = vadd.f32 %v1158, %v1213
    %v1247 = vmul.f32 %v1039, -0.0703125
    %v1248 = vmul.f32 %v1040, -0.0703125
    %v1249 = vmul.f32 %v1041, -0.0703125
    %v1250 = vmul.f32 %v1042, -0.0703125
    %v1251 = vmul.f32 %v1043, -0.0703125
    %v1252 = vmul.f32 %v1044, -0.0703125
    %v1253 = vmul.f32 %v1045, -0.0703125
    %v1254 = vmul.f32 %v1046, -0.0703125
    %v1255 = vmul.f32 %v1047, -0.0703125
    %v1256 = vmul.f32 %v1048, -0.0703125
    %v1257 = vmul.f32 %v1049, -0.0703125
    %v1258 = vmul.f32 %v1050, -0.0703125
    %v1259 = vmul.f32 %v1051, -0.0703125
    %v1260 = vmul.f32 %v1052, -0.0703125
    %v1261 = vmul.f32 %v1053, -0.0703125
    %v1262 = vmul.f32 %v1054, -0.0703125
    %v1279 = vrot.slane %v1247, 3
    %v1280 = vrot.slane %v1248, 3
    %v1281 = vsel %vm570, %v1279, %v1280
    %v1282 = vrot.slane %v1249, 3
    %v1283 = vrot.slane %v1250, 3
    %v1284 = vsel %vm570, %v1282, %v1283
    %v1285 = vrot.slane %v1251, 3
    %v1286 = vrot.slane %v1252, 3
    %v1287 = vsel %vm570, %v1285, %v1286
    %v1288 = vrot.slane %v1253, 3
    %v1289 = vrot.slane %v1254, 3
    %v1290 = vsel %vm570, %v1288, %v1289
    %v1291 = vrot.slane %v1255, 3
    %v1292 = vrot.slane %v1256, 3
    %v1293 = vsel %vm570, %v1291, %v1292
    %v1294 = vrot.slane %v1257, 3
    %v1295 = vrot.slane %v1258, 3
    %v1296 = vsel %vm570, %v1294, %v1295
    %v1297 = vrot.slane %v1259, 3
    %v1298 = vrot.slane %v1260, 3
    %v1299 = vsel %vm570, %v1297, %v1298
    %v1300 = vrot.slane %v1261, 3
    %v1301 = vrot.slane %v1262, 3
    %v1302 = vsel %vm570, %v1300, %v1301
    %v1319 = vadd.f32 %v1231, %v1281
    %v1320 = vadd.f32 %v1232, %v1280
    %v1321 = vadd.f32 %v1233, %v1284
    %v1322 = vadd.f32 %v1234, %v1283
    %v1323 = vadd.f32 %v1235, %v1287
    %v1324 = vadd.f32 %v1236, %v1286
    %v1325 = vadd.f32 %v1237, %v1290
    %v1326 = vadd.f32 %v1238, %v1289
    %v1327 = vadd.f32 %v1239, %v1293
    %v1328 = vadd.f32 %v1240, %v1292
    %v1329 = vadd.f32 %v1241, %v1296
    %v1330 = vadd.f32 %v1242, %v1295
    %v1331 = vadd.f32 %v1243, %v1299
    %v1332 = vadd.f32 %v1244, %v1298
    %v1333 = vadd.f32 %v1245, %v1302
    %v1334 = vadd.f32 %v1246, %v1301
    %s1335 = scalar_lea.vmem %s1, 32
    %1336 = vst.msk [vmem:[%s1335] sm:$0xff] %vm628, %v1319
    %1337 = vst.msk [vmem:[%s1335 + $0x8] sm:$0x1f] %vm630, %v1320
    %1338 = vst.msk [vmem:[%s1335 + $0x40] sm:$0xff] %vm628, %v1321
    %1339 = vst.msk [vmem:[%s1335 + $0x48] sm:$0x1f] %vm630, %v1322
    %1340 = vst.msk [vmem:[%s1335 + $0x80] sm:$0xff] %vm628, %v1323
    %1341 = vst.msk [vmem:[%s1335 + $0x88] sm:$0x1f] %vm630, %v1324
    %1342 = vst.msk [vmem:[%s1335 + $0xc0] sm:$0xff] %vm628, %v1325
    %1343 = vst.msk [vmem:[%s1335 + $0xc8] sm:$0x1f] %vm630, %v1326
    %1344 = vst.msk [vmem:[%s1335 + $0x100] sm:$0xff] %vm628, %v1327
    %1345 = vst.msk [vmem:[%s1335 + $0x108] sm:$0x1f] %vm630, %v1328
    %1346 = vst.msk [vmem:[%s1335 + $0x140] sm:$0xff] %vm628, %v1329
    %1347 = vst.msk [vmem:[%s1335 + $0x148] sm:$0x1f] %vm630, %v1330
    %1348 = vst.msk [vmem:[%s1335 + $0x180] sm:$0xff] %vm628, %v1331
    %1349 = vst.msk [vmem:[%s1335 + $0x188] sm:$0x1f] %vm630, %v1332
    %1350 = vst.msk [vmem:[%s1335 + $0x1c0] sm:$0xff] %vm628, %v1333
    %1351 = vst.msk [vmem:[%s1335 + $0x1c8] sm:$0x1f] %vm630, %v1334
    %v1352 = vrot.slane %v1159, 1
    %v1353 = vrot.slane %v1160, 1
    %v1354 = vsel %vm392, %v1352, %v1353
    %v1355 = vrot.slane %v1161, 1
    %v1356 = vrot.slane %v1162, 1
    %v1357 = vsel %vm392, %v1355, %v1356
    %v1358 = vrot.slane %v1163, 1
    %v1359 = vrot.slane %v1164, 1
    %v1360 = vsel %vm392, %v1358, %v1359
    %v1361 = vrot.slane %v1165, 1
    %v1362 = vrot.slane %v1166, 1
    %v1363 = vsel %vm392, %v1361, %v1362
    %v1364 = vrot.slane %v1167, 1
    %v1365 = vrot.slane %v1168, 1
    %v1366 = vsel %vm392, %v1364, %v1365
    %v1367 = vrot.slane %v1169, 1
    %v1368 = vrot.slane %v1170, 1
    %v1369 = vsel %vm392, %v1367, %v1368
    %v1370 = vrot.slane %v1171, 1
    %v1371 = vrot.slane %v1172, 1
    %v1372 = vsel %vm392, %v1370, %v1371
    %v1373 = vrot.slane %v1173, 1
    %v1374 = vrot.slane %v1174, 1
    %v1375 = vsel %vm392, %v1373, %v1374
    %v1392 = vadd.f32 %v1247, %v1354
    %v1393 = vadd.f32 %v1248, %v1353
    %v1394 = vadd.f32 %v1249, %v1357
    %v1395 = vadd.f32 %v1250, %v1356
    %v1396 = vadd.f32 %v1251, %v1360
    %v1397 = vadd.f32 %v1252, %v1359
    %v1398 = vadd.f32 %v1253, %v1363
    %v1399 = vadd.f32 %v1254, %v1362
    %v1400 = vadd.f32 %v1255, %v1366
    %v1401 = vadd.f32 %v1256, %v1365
    %v1402 = vadd.f32 %v1257, %v1369
    %v1403 = vadd.f32 %v1258, %v1368
    %v1404 = vadd.f32 %v1259, %v1372
    %v1405 = vadd.f32 %v1260, %v1371
    %v1406 = vadd.f32 %v1261, %v1375
    %v1407 = vadd.f32 %v1262, %v1374
    %v1408 = vrot.slane %v1071, 2
    %v1409 = vrot.slane %v1072, 2
    %v1410 = vsel %vm481, %v1408, %v1409
    %v1411 = vrot.slane %v1073, 2
    %v1412 = vrot.slane %v1074, 2
    %v1413 = vsel %vm481, %v1411, %v1412
    %v1414 = vrot.slane %v1075, 2
    %v1415 = vrot.slane %v1076, 2
    %v1416 = vsel %vm481, %v1414, %v1415
    %v1417 = vrot.slane %v1077, 2
    %v1418 = vrot.slane %v1078, 2
    %v1419 = vsel %vm481, %v1417, %v1418
    %v1420 = vrot.slane %v1079, 2
    %v1421 = vrot.slane %v1080, 2
    %v1422 = vsel %vm481, %v1420, %v1421
    %v1423 = vrot.slane %v1081, 2
    %v1424 = vrot.slane %v1082, 2
    %v1425 = vsel %vm481, %v1423, %v1424
    %v1426 = vrot.slane %v1083, 2
    %v1427 = vrot.slane %v1084, 2
    %v1428 = vsel %vm481, %v1426, %v1427
    %v1429 = vrot.slane %v1085, 2
    %v1430 = vrot.slane %v1086, 2
    %v1431 = vsel %vm481, %v1429, %v1430
    %v1448 = vadd.f32 %v1392, %v1410
    %v1449 = vadd.f32 %v1393, %v1409
    %v1450 = vadd.f32 %v1394, %v1413
    %v1451 = vadd.f32 %v1395, %v1412
    %v1452 = vadd.f32 %v1396, %v1416
    %v1453 = vadd.f32 %v1397, %v1415
    %v1454 = vadd.f32 %v1398, %v1419
    %v1455 = vadd.f32 %v1399, %v1418
    %v1456 = vadd.f32 %v1400, %v1422
    %v1457 = vadd.f32 %v1401, %v1421
    %v1458 = vadd.f32 %v1402, %v1425
    %v1459 = vadd.f32 %v1403, %v1424
    %v1460 = vadd.f32 %v1404, %v1428
    %v1461 = vadd.f32 %v1405, %v1427
    %v1462 = vadd.f32 %v1406, %v1431
    %v1463 = vadd.f32 %v1407, %v1430
    %v1480 = vrot.slane %v1055, 3
    %v1481 = vrot.slane %v1056, 3
    %v1482 = vsel %vm570, %v1480, %v1481
    %v1483 = vrot.slane %v1057, 3
    %v1484 = vrot.slane %v1058, 3
    %v1485 = vsel %vm570, %v1483, %v1484
    %v1486 = vrot.slane %v1059, 3
    %v1487 = vrot.slane %v1060, 3
    %v1488 = vsel %vm570, %v1486, %v1487
    %v1489 = vrot.slane %v1061, 3
    %v1490 = vrot.slane %v1062, 3
    %v1491 = vsel %vm570, %v1489, %v1490
    %v1492 = vrot.slane %v1063, 3
    %v1493 = vrot.slane %v1064, 3
    %v1494 = vsel %vm570, %v1492, %v1493
    %v1495 = vrot.slane %v1065, 3
    %v1496 = vrot.slane %v1066, 3
    %v1497 = vsel %vm570, %v1495, %v1496
    %v1498 = vrot.slane %v1067, 3
    %v1499 = vrot.slane %v1068, 3
    %v1500 = vsel %vm570, %v1498, %v1499
    %v1501 = vrot.slane %v1069, 3
    %v1502 = vrot.slane %v1070, 3
    %v1503 = vsel %vm570, %v1501, %v1502
    %v1520 = vadd.f32 %v1448, %v1482
    %v1521 = vadd.f32 %v1449, %v1481
    %v1522 = vadd.f32 %v1450, %v1485
    %v1523 = vadd.f32 %v1451, %v1484
    %v1524 = vadd.f32 %v1452, %v1488
    %v1525 = vadd.f32 %v1453, %v1487
    %v1526 = vadd.f32 %v1454, %v1491
    %v1527 = vadd.f32 %v1455, %v1490
    %v1528 = vadd.f32 %v1456, %v1494
    %v1529 = vadd.f32 %v1457, %v1493
    %v1530 = vadd.f32 %v1458, %v1497
    %v1531 = vadd.f32 %v1459, %v1496
    %v1532 = vadd.f32 %v1460, %v1500
    %v1533 = vadd.f32 %v1461, %v1499
    %v1534 = vadd.f32 %v1462, %v1503
    %v1535 = vadd.f32 %v1463, %v1502
    %1536 = vst.msk [vmem:[%s1] sm:$0xff] %vm628, %v1520
    %1537 = vst.msk [vmem:[%s1 + $0x8] sm:$0x1f] %vm630, %v1521
    %1538 = vst.msk [vmem:[%s1 + $0x40] sm:$0xff] %vm628, %v1522
    %1539 = vst.msk [vmem:[%s1 + $0x48] sm:$0x1f] %vm630, %v1523
    %1540 = vst.msk [vmem:[%s1 + $0x80] sm:$0xff] %vm628, %v1524
    %1541 = vst.msk [vmem:[%s1 + $0x88] sm:$0x1f] %vm630, %v1525
    %1542 = vst.msk [vmem:[%s1 + $0xc0] sm:$0xff] %vm628, %v1526
    %1543 = vst.msk [vmem:[%s1 + $0xc8] sm:$0x1f] %vm630, %v1527
    %1544 = vst.msk [vmem:[%s1 + $0x100] sm:$0xff] %vm628, %v1528
    %1545 = vst.msk [vmem:[%s1 + $0x108] sm:$0x1f] %vm630, %v1529
    %1546 = vst.msk [vmem:[%s1 + $0x140] sm:$0xff] %vm628, %v1530
    %1547 = vst.msk [vmem:[%s1 + $0x148] sm:$0x1f] %vm630, %v1531
    %1548 = vst.msk [vmem:[%s1 + $0x180] sm:$0xff] %vm628, %v1532
    %1549 = vst.msk [vmem:[%s1 + $0x188] sm:$0x1f] %vm630, %v1533
    %1550 = vst.msk [vmem:[%s1 + $0x1c0] sm:$0xff] %vm628, %v1534
    %1551 = vst.msk [vmem:[%s1 + $0x1c8] sm:$0x1f] %vm630, %v1535
    // Predicated region
    $region10: #{_lambda_.1} parent=1 // pred_check
      _
    $region11: #{_lambda_.1} parent=1 // pred_check_branch
      %1553 = sbr.rel (0) target = $region13
    $region12: #{_lambda_.1} parent=1 // pred_region
      _
    $region13: #{_lambda_.1} parent=1 // pred_fallthru
      _
    // Predicated region
    $region14: #{_lambda_.1} parent=1 // pred_check
      _
    $region15: #{_lambda_.1} parent=1 // pred_check_branch
      %1555 = sbr.rel (0) target = $region17
    $region16: #{_lambda_.1} parent=1 // pred_region
      _
    $region17: #{_lambda_.1} parent=1 // pred_fallthru
      _
    %1556 = vsyncpa [#allocation3], 1

</llo_original>
